<compile_context>
chip_gen: v7x
topology: tpu7x:2x2x1
jax: 0.10.0
libtpu: 0.0.40
codegen_flags: <defaults>
</compile_context>

<pallas_src>
import functools

import jax
import jax.numpy as jnp
from jax.experimental import pallas as pl
from jax.experimental.pallas import tpu as pltpu


def _cdiv(a, b):
    return (a + b - 1) // b


def _round_up(x, m):
    return ((x + m - 1) // m) * m


def _pow_term(x, exponent):
    """x ** exponent with cheap paths for small integer exponents."""
    if exponent == 2.0:
        return x * x
    if float(exponent).is_integer() and 1.0 <= exponent <= 16.0:
        e = int(exponent)
        result = None
        base = x
        while e:
            if e & 1:
                result = base if result is None else result * base
            e >>= 1
            if e:
                base = base * base
        return result
    # TODO(synk): true float exponents lower via exp/log on the EUP and are only
    # exact for strictly positive inputs.
    return jnp.power(x, exponent)


def _dice_partial_kernel(pred_ref, tgt_ref, mask_ref, num_out_ref, den_out_ref,
                         num_acc, den_acc, *,
                         n_valid, tile, k_per, exponent, needs_mask):
    # pred_ref/tgt_ref: (B, C, tile)   mask_ref: (B, tile)
    # num_out_ref/den_out_ref: (1, B, C)   num_acc/den_acc: (B, C, 128) f32
    k = pl.program_id(1)

    @pl.when(k == 0)
    def _init():
        num_acc[...] = jnp.zeros_like(num_acc)
        den_acc[...] = jnp.zeros_like(den_acc)

    if needs_mask:
        # Element offset of the first lane of this LOGICAL tile (the BlockSpec
        # may have clamped the physical block; masking uses the logical index).
        tile_start = (pl.program_id(0) * k_per + k) * tile
        lane = jax.lax.broadcasted_iota(jnp.int32, (1, 1, 128), 2)

    n_chunks = tile // 128
    num_fold = None
    den_fold = None
    for j in range(n_chunks):
        lo = j * 128
        # Static, 128-aligned lane slices: no relayout, cast after VMEM load.
        p = pred_ref[:, :, lo:lo + 128].astype(jnp.float32)
        t = tgt_ref[:, :, lo:lo + 128].astype(jnp.float32)
        m = mask_ref[:, lo:lo + 128].astype(jnp.float32)[:, None, :]

        nterm = p * t * m
        dterm = (_pow_term(p, exponent) + _pow_term(t, exponent)) * m
        if needs_mask:
            valid = (tile_start + lo + lane) < n_valid       # (1, 1, 128)
            # Select (not multiply): OOB lanes may hold NaN/Inf garbage.
            nterm = jnp.where(valid, nterm, 0.0)
            dterm = jnp.where(valid, dterm, 0.0)

        num_fold = nterm if num_fold is None else num_fold + nterm
        den_fold = dterm if den_fold is None else den_fold + dterm

    # Single (B, C, 128) += into scratch per grid step.
    num_acc[...] += num_fold
    den_acc[...] += den_fold

    @pl.when(k == pl.num_programs(1) - 1)
    def _finalize():
        num_out_ref[...] = jnp.sum(num_acc[...], axis=-1)[None, :, :]
        den_out_ref[...] = jnp.sum(den_acc[...], axis=-1)[None, :, :]


def dice_loss(pred, target, valid_mask, *, loss_weight=1.0, smooth=1.0,
              exponent=2.0, tile_n=2048):
    """pred/target: (B, C, H, W); valid_mask: (B, H, W). Returns scalar f32."""
    B, C, H, W = pred.shape
    assert target.shape == (B, C, H, W)
    assert valid_mask.shape == (B, H, W)
    N = H * W

    # Contiguous reshapes only (no copy, no pad): bytes from HBM are the cost.
    p = pred.reshape(B, C, N)
    t = target.reshape(B, C, N)
    m = valid_mask.reshape(B, N)

    # ---- tile sizing against a per-generation VMEM budget -------------------
    try:
        vmem_cap = int(pltpu.get_tpu_info().vmem_capacity_bytes)
    except Exception:
        vmem_cap = 64 * 1024 * 1024          # conservative: v7x per-core VMEM
    budget = (vmem_cap * 3) // 5             # headroom for Mosaic internals

    pt_bytes = pred.dtype.itemsize + target.dtype.itemsize
    bytes_per_col = B * C * pt_bytes + B * valid_mask.dtype.itemsize
    acc_bytes = 2 * B * C * 128 * 4          # two (B, C, 128) f32 accumulators

    tile = min(int(tile_n), _round_up(N, 128))
    tile = max(128, (tile // 128) * 128)
    while tile > 128 and (2 * tile * bytes_per_col + acc_bytes) > budget:
        tile -= 128

    num_tiles = _cdiv(N, tile)
    P = 2 if num_tiles >= 2 else 1           # sharded across TCs on v7x
    k_per = _cdiv(num_tiles, P)
    needs_mask = (N % tile != 0) or (P * k_per != num_tiles)

    if P * k_per == num_tiles:
        def tile_index(pi, ki):
            return pi * k_per + ki
    else:
        last_tile = num_tiles - 1
        def tile_index(pi, ki):
            # Clamp fully-out-of-range logical tiles onto the last real block;
            # their contribution is zeroed in-kernel by the lane-index select.
            return jnp.minimum(pi * k_per + ki, last_tile)

    grid = (P, k_per)

    vmem_needed = 2 * tile * bytes_per_col + acc_bytes + (1 << 20)
    vmem_limit = int(min(vmem_cap, max(2 * vmem_needed, 32 * 1024 * 1024)))

    kernel = functools.partial(
        _dice_partial_kernel,
        n_valid=N, tile=tile, k_per=k_per,
        exponent=float(exponent), needs_mask=needs_mask)

    num_part, den_part = pl.pallas_call(
        kernel,
        out_shape=(jax.ShapeDtypeStruct((P, B, C), jnp.float32),
                   jax.ShapeDtypeStruct((P, B, C), jnp.float32)),
        grid_spec=pltpu.PrefetchScalarGridSpec(
            num_scalar_prefetch=0,
            grid=grid,
            in_specs=[
                pl.BlockSpec((B, C, tile), lambda pi, ki: (0, 0, tile_index(pi, ki))),
                pl.BlockSpec((B, C, tile), lambda pi, ki: (0, 0, tile_index(pi, ki))),
                pl.BlockSpec((B, tile), lambda pi, ki: (0, tile_index(pi, ki))),
            ],
            out_specs=[
                pl.BlockSpec((1, B, C), lambda pi, ki: (pi, 0, 0)),
                pl.BlockSpec((1, B, C), lambda pi, ki: (pi, 0, 0)),
            ],
            scratch_shapes=[
                pltpu.VMEM((B, C, 128), jnp.float32),
                pltpu.VMEM((B, C, 128), jnp.float32),
            ],
        ),
        compiler_params=pltpu.CompilerParams(
            dimension_semantics=("parallel", "arbitrary"),
            vmem_limit_bytes=vmem_limit),
    )(p, t, m)

    # Tiny epilogue in plain JAX (a few hundred bytes): combine parallel-slice
    # partials, form dice, mean over (B, C)  ==  mean over B then sum/C.
    num = 2.0 * jnp.sum(num_part, axis=0) + smooth          # (B, C)
    den = jnp.sum(den_part, axis=0) + smooth                 # (B, C)
    dice = 1.0 - num / den
    return (loss_weight * jnp.mean(dice)).astype(jnp.float32)


def _dice_loss_ref(pred, target, valid_mask, *, loss_weight=1.0, smooth=1.0,
                   exponent=2.0):
    """Pure-JAX reference mirroring the PyTorch module exactly."""
    B, C, H, W = pred.shape
    pred = jnp.asarray(pred, jnp.float32)
    target = jnp.asarray(target, jnp.float32)
    valid_mask = jnp.asarray(valid_mask, jnp.float32)
    total = 0.0
    for c in range(C):
        p = pred[:, c].reshape(B, -1)
        t = target[:, c].reshape(B, -1)
        m = valid_mask.reshape(B, -1)
        num = jnp.sum(p * t * m, axis=1) * 2 + smooth
        den = jnp.sum((p ** exponent + t ** exponent) * m, axis=1) + smooth
        total = total + jnp.mean(1 - num / den)   # weighted_loss reduction='mean'
    return loss_weight * total / C


if __name__ == "__main__":
    key = jax.random.PRNGKey(0)
    k = jax.random.split(key, 6)

    # Test 1: f32 inputs, aligned spatial size -> single tile, no mask path.
    B, C, H, W = 2, 4, 16, 16
    pred = jax.nn.sigmoid(jax.random.normal(k[0], (B, C, H, W), jnp.float32))
    target = (jax.random.uniform(k[1], (B, C, H, W)) > 0.5).astype(jnp.float32)
    mask = (jax.random.uniform(k[2], (B, H, W)) > 0.2).astype(jnp.float32)

    out = jax.block_until_ready(dice_loss(pred, target, mask,
                                          loss_weight=1.0, smooth=1.0,
                                          exponent=2.0))
    ref = _dice_loss_ref(pred, target, mask,
                         loss_weight=1.0, smooth=1.0, exponent=2.0)
    assert jnp.allclose(out, ref, rtol=1e-5, atol=1e-6), (out, ref)

    # Test 2: bf16 pred/target + bf16 mask, non-128-multiple spatial size
    # (N=324 -> 3 tiles of 128), odd tile count -> 2-way parallel split with a
    # clamped duplicate tile and a partial trailing tile (exercises the
    # iota/where masking, clamped index_map and multi-step accumulation).
    B2, C2, H2, W2 = 2, 3, 18, 18
    pred2 = jax.nn.sigmoid(
        jax.random.normal(k[3], (B2, C2, H2, W2), jnp.float32)).astype(jnp.bfloat16)
    target2 = (jax.random.uniform(k[4], (B2, C2, H2, W2)) > 0.5).astype(jnp.bfloat16)
    mask2 = (jax.random.uniform(k[5], (B2, H2, W2)) > 0.2).astype(jnp.bfloat16)

    out2 = jax.block_until_ready(dice_loss(pred2, target2, mask2,
                                           loss_weight=2.0, smooth=1.0,
                                           exponent=2.0, tile_n=128))
    ref2 = _dice_loss_ref(pred2, target2, mask2,
                          loss_weight=2.0, smooth=1.0, exponent=2.0)
    assert jnp.allclose(out2, ref2, rtol=1e-4, atol=1e-5), (out2, ref2)

    # Test 3: integer exponent != 2 (repeated-multiply path, no exp/log pow).
    out3 = jax.block_until_ready(dice_loss(pred, target, mask, exponent=3.0))
    ref3 = _dice_loss_ref(pred, target, mask, exponent=3.0)
    assert jnp.allclose(out3, ref3, rtol=1e-5, atol=1e-6), (out3, ref3)

    print("KERNEL_OK")
</pallas_src>

<mosaic_0001>
module attributes {stable_mosaic.version = 11 : i64} {
  func.func @_dice_partial_kernel(%arg0: i32, %arg1: i32, %arg2: memref<2x4x256xf32, #tpu.memory_space<vmem>>, %arg3: memref<2x4x256xf32, #tpu.memory_space<vmem>>, %arg4: memref<2x256xf32, #tpu.memory_space<vmem>>, %arg5: memref<1x2x4xf32, #tpu.memory_space<vmem>>, %arg6: memref<1x2x4xf32, #tpu.memory_space<vmem>>, %arg7: memref<2x4x128xf32, #tpu.memory_space<vmem>>, %arg8: memref<2x4x128xf32, #tpu.memory_space<vmem>>) attributes {dimension_semantics = [#tpu.dimension_semantics<parallel>, #tpu.dimension_semantics<arbitrary>], iteration_bounds = array<i64: 1, 1>, scalar_prefetch = 0 : i64, scratch_operands = 2 : i64, tpu.core_type = #tpu.core_type<tc>, window_params = [{transform_indices = @transform_0, window_bounds = array<i64: 2, 4, 256>}, {transform_indices = @transform_1, window_bounds = array<i64: 2, 4, 256>}, {transform_indices = @transform_2, window_bounds = array<i64: 2, 256>}, {transform_indices = @transform_3, window_bounds = array<i64: 1, 2, 4>}, {transform_indices = @transform_4, window_bounds = array<i64: 1, 2, 4>}]} {
    %c0_i32 = arith.constant 0 : i32
    %0 = arith.cmpi eq, %arg1, %c0_i32 : i32
    %1 = arith.extui %0 : i1 to i32
    %c0_i32_0 = arith.constant 0 : i32
    %2 = arith.cmpi ne, %1, %c0_i32_0 : i32
    scf.if %2 {
      %cst = arith.constant 0.000000e+00 : f32
      %38 = vector.broadcast %cst : f32 to vector<2x4x128xf32>
      %c0_29 = arith.constant 0 : index
      %c0_30 = arith.constant 0 : index
      %c0_31 = arith.constant 0 : index
      %39 = vector.load %arg7[%c0_29, %c0_30, %c0_31] : memref<2x4x128xf32, #tpu.memory_space<vmem>>, vector<2x4x128xf32>
      tpu.vector_store %arg7[%c0_29, %c0_30, %c0_31], %38 {strides = array<i32>} : memref<2x4x128xf32, #tpu.memory_space<vmem>>, vector<2x4x128xf32>,
      %cst_32 = arith.constant 0.000000e+00 : f32
      %40 = vector.broadcast %cst_32 : f32 to vector<2x4x128xf32>
      %c0_33 = arith.constant 0 : index
      %c0_34 = arith.constant 0 : index
      %c0_35 = arith.constant 0 : index
      %41 = vector.load %arg8[%c0_33, %c0_34, %c0_35] : memref<2x4x128xf32, #tpu.memory_space<vmem>>, vector<2x4x128xf32>
      tpu.vector_store %arg8[%c0_33, %c0_34, %c0_35], %40 {strides = array<i32>} : memref<2x4x128xf32, #tpu.memory_space<vmem>>, vector<2x4x128xf32>,
    } else {
    }
    %c0 = arith.constant 0 : index
    %c0_1 = arith.constant 0 : index
    %c0_2 = arith.constant 0 : index
    %3 = vector.load %arg2[%c0, %c0_1, %c0_2] : memref<2x4x256xf32, #tpu.memory_space<vmem>>, vector<2x4x128xf32>
    %c0_3 = arith.constant 0 : index
    %c0_4 = arith.constant 0 : index
    %c0_5 = arith.constant 0 : index
    %4 = vector.load %arg3[%c0_3, %c0_4, %c0_5] : memref<2x4x256xf32, #tpu.memory_space<vmem>>, vector<2x4x128xf32>
    %c0_6 = arith.constant 0 : index
    %c0_7 = arith.constant 0 : index
    %5 = vector.load %arg4[%c0_6, %c0_7] : memref<2x256xf32, #tpu.memory_space<vmem>>, vector<2x128xf32>
    %6 = vector.shape_cast %5 : vector<2x128xf32> to vector<2x1x128xf32>
    %7 = arith.mulf %3, %4 : vector<2x4x128xf32>
    %8 = vector.broadcast %6 : vector<2x1x128xf32> to vector<2x4x128xf32>
    %9 = arith.mulf %7, %8 : vector<2x4x128xf32>
    %10 = arith.mulf %3, %3 : vector<2x4x128xf32>
    %11 = arith.mulf %4, %4 : vector<2x4x128xf32>
    %12 = arith.addf %10, %11 : vector<2x4x128xf32>
    %13 = vector.broadcast %6 : vector<2x1x128xf32> to vector<2x4x128xf32>
    %14 = arith.mulf %12, %13 : vector<2x4x128xf32>
    %c0_8 = arith.constant 0 : index
    %c0_9 = arith.constant 0 : index
    %c128 = arith.constant 128 : index
    %15 = vector.load %arg2[%c0_8, %c0_9, %c128] : memref<2x4x256xf32, #tpu.memory_space<vmem>>, vector<2x4x128xf32>
    %c0_10 = arith.constant 0 : index
    %c0_11 = arith.constant 0 : index
    %c128_12 = arith.constant 128 : index
    %16 = vector.load %arg3[%c0_10, %c0_11, %c128_12] : memref<2x4x256xf32, #tpu.memory_space<vmem>>, vector<2x4x128xf32>
    %c0_13 = arith.constant 0 : index
    %c128_14 = arith.constant 128 : index
    %17 = vector.load %arg4[%c0_13, %c128_14] : memref<2x256xf32, #tpu.memory_space<vmem>>, vector<2x128xf32>
    %18 = vector.shape_cast %17 : vector<2x128xf32> to vector<2x1x128xf32>
    %19 = arith.mulf %15, %16 : vector<2x4x128xf32>
    %20 = vector.broadcast %18 : vector<2x1x128xf32> to vector<2x4x128xf32>
    %21 = arith.mulf %19, %20 : vector<2x4x128xf32>
    %22 = arith.mulf %15, %15 : vector<2x4x128xf32>
    %23 = arith.mulf %16, %16 : vector<2x4x128xf32>
    %24 = arith.addf %22, %23 : vector<2x4x128xf32>
    %25 = vector.broadcast %18 : vector<2x1x128xf32> to vector<2x4x128xf32>
    %26 = arith.mulf %24, %25 : vector<2x4x128xf32>
    %27 = arith.addf %9, %21 : vector<2x4x128xf32>
    %28 = arith.addf %14, %26 : vector<2x4x128xf32>
    %c0_15 = arith.constant 0 : index
    %c0_16 = arith.constant 0 : index
    %c0_17 = arith.constant 0 : index
    %29 = vector.load %arg7[%c0_15, %c0_16, %c0_17] : memref<2x4x128xf32, #tpu.memory_space<vmem>>, vector<2x4x128xf32>
    %30 = arith.addf %29, %27 : vector<2x4x128xf32>
    %c0_18 = arith.constant 0 : index
    %c0_19 = arith.constant 0 : index
    %c0_20 = arith.constant 0 : index
    %31 = vector.load %arg7[%c0_18, %c0_19, %c0_20] : memref<2x4x128xf32, #tpu.memory_space<vmem>>, vector<2x4x128xf32>
    tpu.vector_store %arg7[%c0_18, %c0_19, %c0_20], %30 {strides = array<i32>} : memref<2x4x128xf32, #tpu.memory_space<vmem>>, vector<2x4x128xf32>,
    %c0_21 = arith.constant 0 : index
    %c0_22 = arith.constant 0 : index
    %c0_23 = arith.constant 0 : index
    %32 = vector.load %arg8[%c0_21, %c0_22, %c0_23] : memref<2x4x128xf32, #tpu.memory_space<vmem>>, vector<2x4x128xf32>
    %33 = arith.addf %32, %28 : vector<2x4x128xf32>
    %c0_24 = arith.constant 0 : index
    %c0_25 = arith.constant 0 : index
    %c0_26 = arith.constant 0 : index
    %34 = vector.load %arg8[%c0_24, %c0_25, %c0_26] : memref<2x4x128xf32, #tpu.memory_space<vmem>>, vector<2x4x128xf32>
    tpu.vector_store %arg8[%c0_24, %c0_25, %c0_26], %33 {strides = array<i32>} : memref<2x4x128xf32, #tpu.memory_space<vmem>>, vector<2x4x128xf32>,
    %c0_i32_27 = arith.constant 0 : i32
    %35 = arith.cmpi eq, %arg1, %c0_i32_27 : i32
    %36 = arith.extui %35 : i1 to i32
    %c0_i32_28 = arith.constant 0 : i32
    %37 = arith.cmpi ne, %36, %c0_i32_28 : i32
    scf.if %37 {
      %c0_29 = arith.constant 0 : index
      %c0_30 = arith.constant 0 : index
      %c0_31 = arith.constant 0 : index
      %38 = vector.load %arg7[%c0_29, %c0_30, %c0_31] : memref<2x4x128xf32, #tpu.memory_space<vmem>>, vector<2x4x128xf32>
      %cst = arith.constant dense<0.000000e+00> : vector<2x4xf32>
      %39 = vector.multi_reduction <add>, %38, %cst [2] : vector<2x4x128xf32> to vector<2x4xf32>
      %40 = vector.shape_cast %39 : vector<2x4xf32> to vector<1x2x4xf32>
      %c0_32 = arith.constant 0 : index
      %c0_33 = arith.constant 0 : index
      %c0_34 = arith.constant 0 : index
      %41 = vector.load %arg5[%c0_32, %c0_33, %c0_34] : memref<1x2x4xf32, #tpu.memory_space<vmem>>, vector<1x2x4xf32>
      tpu.vector_store %arg5[%c0_32, %c0_33, %c0_34], %40 {strides = array<i32>} : memref<1x2x4xf32, #tpu.memory_space<vmem>>, vector<1x2x4xf32>,
      %c0_35 = arith.constant 0 : index
      %c0_36 = arith.constant 0 : index
      %c0_37 = arith.constant 0 : index
      %42 = vector.load %arg8[%c0_35, %c0_36, %c0_37] : memref<2x4x128xf32, #tpu.memory_space<vmem>>, vector<2x4x128xf32>
      %cst_38 = arith.constant dense<0.000000e+00> : vector<2x4xf32>
      %43 = vector.multi_reduction <add>, %42, %cst_38 [2] : vector<2x4x128xf32> to vector<2x4xf32>
      %44 = vector.shape_cast %43 : vector<2x4xf32> to vector<1x2x4xf32>
      %c0_39 = arith.constant 0 : index
      %c0_40 = arith.constant 0 : index
      %c0_41 = arith.constant 0 : index
      %45 = vector.load %arg6[%c0_39, %c0_40, %c0_41] : memref<1x2x4xf32, #tpu.memory_space<vmem>>, vector<1x2x4xf32>
      tpu.vector_store %arg6[%c0_39, %c0_40, %c0_41], %44 {strides = array<i32>} : memref<1x2x4xf32, #tpu.memory_space<vmem>>, vector<1x2x4xf32>,
    } else {
    }
    return
  }
  func.func @transform_0(%arg0: i32, %arg1: i32) -> (i32, i32, i32) {
    %c1_i32 = arith.constant 1 : i32
    %0 = arith.muli %arg0, %c1_i32 : i32
    %1 = arith.addi %0, %arg1 : i32
    %c0_i32 = arith.constant 0 : i32
    %c0_i32_0 = arith.constant 0 : i32
    %c0_i32_1 = arith.constant 0 : i32
    return %c0_i32, %c0_i32_0, %1 : i32, i32, i32
  }
  func.func @transform_1(%arg0: i32, %arg1: i32) -> (i32, i32, i32) {
    %c1_i32 = arith.constant 1 : i32
    %0 = arith.muli %arg0, %c1_i32 : i32
    %1 = arith.addi %0, %arg1 : i32
    %c0_i32 = arith.constant 0 : i32
    %c0_i32_0 = arith.constant 0 : i32
    %c0_i32_1 = arith.constant 0 : i32
    return %c0_i32, %c0_i32_0, %1 : i32, i32, i32
  }
  func.func @transform_2(%arg0: i32, %arg1: i32) -> (i32, i32) {
    %c1_i32 = arith.constant 1 : i32
    %0 = arith.muli %arg0, %c1_i32 : i32
    %1 = arith.addi %0, %arg1 : i32
    %c0_i32 = arith.constant 0 : i32
    %c0_i32_0 = arith.constant 0 : i32
    return %c0_i32, %1 : i32, i32
  }
  func.func @transform_3(%arg0: i32, %arg1: i32) -> (i32, i32, i32) {
    %c0_i32 = arith.constant 0 : i32
    %c0_i32_0 = arith.constant 0 : i32
    %c0_i32_1 = arith.constant 0 : i32
    return %arg0, %c0_i32, %c0_i32_0 : i32, i32, i32
  }
  func.func @transform_4(%arg0: i32, %arg1: i32) -> (i32, i32, i32) {
    %c0_i32 = arith.constant 0 : i32
    %c0_i32_0 = arith.constant 0 : i32
    %c0_i32_1 = arith.constant 0 : i32
    return %arg0, %c0_i32, %c0_i32_0 : i32, i32, i32
  }
}

</mosaic_0001>

<llo_original>
// kernel: tpu_custom_call.1
$region0: #{tpu_custom_call.1}
  #allocation0 [shape = 'u32[]', space=smem, size = 0x4, offset = 0x4, fixed_abs, tag = 'smem constant byte address 0x4 - core index']
  #allocation1 [shape = 'u32[144,128]{1,0:T(1,128)}', space=vmem, size = 0x12000, scoped, tag = 'internal scratch']
  #allocation2 [shape = 'f32[2,4,128]{2,1,0:T(4,128)}', space=vmem, size = 0x1000, scoped, tag = 'scratch operand']
  #allocation3 [shape = 'f32[2,4,128]{2,1,0:T(4,128)}', space=vmem, size = 0x1000, scoped, tag = 'scratch operand']
  %s0 = inlined_call_operand.hbm [shape: f32[2,4,256], index: 0, kind: input, shape index: {}]
  %s1 = inlined_call_operand.hbm [shape: f32[2,4,256], index: 1, kind: input, shape index: {}]
  %s2 = inlined_call_operand.vmem [shape: f32[2,256], index: 2, kind: input, shape index: {}]
  %s3 = inlined_call_operand.hbm [shape: f32[1,2,4], index: 3, kind: output, shape index: {0}]
  %s4 = inlined_call_operand.hbm [shape: f32[1,2,4], index: 4, kind: output, shape index: {1}]
  %5 = xla_tuple %s3, %s4
  %s6 = sld [smem:[#allocation0]]
  $region46: #{tpu_custom_call.1} parent=0
    _
  %s8 = ssub.s32 1, %s6
  %s9 = scalar_select 0, %s8, %s6
  $region1: #{tpu_custom_call.1} parent=0
    #allocation4 [shape = 'u8[8192]{0}', space=vmem, size = 0x2000, scoped, tag = 'input window, operand 0, single buffered']
    #allocation5 [shape = 's32[1]{0}', space=sflag, size = 0x4, scoped, tag = 'scoped memory for tpu_custom_call.1']
    #allocation6 [shape = 's32[1]{0}', space=sflag, size = 0x4, scoped, tag = 'scoped memory for tpu_custom_call.1']
    #allocation7 [shape = 'u8[8192]{0}', space=vmem, size = 0x2000, scoped, tag = 'input window, operand 1, single buffered']
    #allocation8 [shape = 's32[1]{0}', space=sflag, size = 0x4, scoped, tag = 'scoped memory for tpu_custom_call.1']
    #allocation9 [shape = 'u8[1024]{0}', space=vmem, size = 0x400, scoped, tag = 'output window, operand 0, single buffered']
    #allocation10 [shape = 'u8[1024]{0}', space=vmem, size = 0x400, scoped, tag = 'output window, operand 1, single buffered']
    #allocation11 [shape = 's32[1]{0}', space=sflag, size = 0x4, scoped, tag = 'scoped memory for tpu_custom_call.1']
    %10 = vsyncpa [#allocation5], 0
    %11 = vsyncpa [#allocation8], 0
    %12 = vsyncpa [#allocation6], 0
    %13 = vsyncpa [#allocation11], 0
    // Predicated region
    $region2: #{tpu_custom_call.1} parent=1 // pred_check
      _
    $region3: #{tpu_custom_call.1} parent=1 // pred_check_branch
      %15 = sbr.rel (0) target = $region5
    $region4: #{tpu_custom_call.1} parent=1 // pred_region
      %s16 = sadd.s32 0, 0
      %s17 = smul.u32 2, %s16
      %s19 = ssub.s32 256, 256
      %20 = vsyncadd [#allocation5], %s19
      %s21 = smul.addr %s17, 64
      %s22 = scalar_lea.hbm %s0, %s21
      %s23 = sshll.u32 [#allocation4], 4
      %s24 = int_to_ptr.vmem [resolvable:$true] %s23
      %29 = dma.hbm_to_vmem [thread:$0]  %s22, 256, %s24, [#allocation5], 128, 128, 8
    $region5: #{tpu_custom_call.1} parent=1 // pred_fallthru
      _
    // Predicated region
    $region6: #{tpu_custom_call.1} parent=1 // pred_check
      _
    $region7: #{tpu_custom_call.1} parent=1 // pred_check_branch
      %31 = sbr.rel (0) target = $region9
    $region8: #{tpu_custom_call.1} parent=1 // pred_region
      %s32 = sadd.s32 0, 0
      %s33 = smul.u32 2, %s32
      %s35 = ssub.s32 256, 256
      %36 = vsyncadd [#allocation8], %s35
      %s37 = smul.addr %s33, 64
      %s38 = scalar_lea.hbm %s1, %s37
      %s39 = sshll.u32 [#allocation7], 4
      %s40 = int_to_ptr.vmem [resolvable:$true] %s39
      %45 = dma.hbm_to_vmem [thread:$0]  %s38, 256, %s40, [#allocation8], 128, 128, 8
    $region9: #{tpu_custom_call.1} parent=1 // pred_fallthru
      _
    // Predicated region
    $region10: #{tpu_custom_call.1} parent=1 // pred_check
      _
    $region11: #{tpu_custom_call.1} parent=1 // pred_check_branch
      %47 = sbr.rel (0) target = $region13
    $region12: #{tpu_custom_call.1} parent=1 // pred_region
      %s48 = sadd.s32 0, 0
      %s49 = smul.u32 2, %s48
      %p50 = scmp.lt.s32.totalorder %s49, 1
      %s51 = scalar_select %p50, %s49, 1
      %s52 = smul.addr %s51, 2
      %s53 = scalar_lea.vmem %s2, %s52
      %s54 = sadd.s32 0, 0
      %s55 = smul.u32 2, %s54
    $region13: #{tpu_custom_call.1} parent=1 // pred_fallthru
      _
    // Predicated region
    $region14: #{tpu_custom_call.1} parent=1 // pred_check
      _
    $region15: #{tpu_custom_call.1} parent=1 // pred_check_branch
      %57 = sbr.rel (0) target = $region17
    $region16: #{tpu_custom_call.1} parent=1 // pred_region
      %58 = dma.done [#allocation5], 256
    $region17: #{tpu_custom_call.1} parent=1 // pred_fallthru
      _
    // Predicated region
    $region18: #{tpu_custom_call.1} parent=1 // pred_check
      _
    $region19: #{tpu_custom_call.1} parent=1 // pred_check_branch
      %60 = sbr.rel (0) target = $region21
    $region20: #{tpu_custom_call.1} parent=1 // pred_region
      %61 = dma.done [#allocation8], 256
    $region21: #{tpu_custom_call.1} parent=1 // pred_fallthru
      _
    %s62 = sadd.s32 0, 0
    %s63 = smul.u32 2, %s62
    %p64 = scmp.lt.s32.totalorder %s63, 1
    %s65 = scalar_select %p64, %s63, 1
    %s66 = smul.addr %s65, 2
    %s67 = scalar_lea.vmem %s2, %s66
    %s68 = sadd.s32 0, 0
    %s69 = smul.u32 2, %s68
    %s70 = sadd.s32 0, 0
    %s71 = smul.u32 2, %s70
    %s72 = sadd.s32 0, 0
    %s73 = smul.u32 2, %s72
    %p74 = scmp.lt.s32.totalorder %s73, 1
    %s75 = scalar_select %p74, %s73, 1
    %s76 = smul.addr %s75, 2
    %s77 = scalar_lea.vmem %s2, %s76
    %s78 = sadd.s32 0, 0
    %s79 = smul.u32 2, %s78
    %p80 = scmp.eq.s32.totalorder 0, 0
    // Predicated region
    $region22: #{tpu_custom_call.1} parent=1 // pred_check
      %p81 = pneg %p80
    $region23: #{tpu_custom_call.1} parent=1 // pred_check_branch
      %83 = sbr.rel (%p81) target = $region25
    $region24: #{tpu_custom_call.1} parent=1 // pred_region
      %84 = vst [vmem:[#allocation2] sm:$0xf] 0.0
      %85 = vst [vmem:[#allocation2 + $0x4] sm:$0xf] 0.0
      %86 = vst [vmem:[#allocation3] sm:$0xf] 0.0
      %87 = vst [vmem:[#allocation3 + $0x4] sm:$0xf] 0.0
    $region25: #{tpu_custom_call.1} parent=1 // pred_fallthru
      _
    %v88 = vld [vmem:[#allocation4] sm:$0xf]
    %v89 = vld [vmem:[#allocation4 + $0x8] sm:$0xf]
    %v90 = vld [vmem:[#allocation7] sm:$0xf]
    %v91 = vld [vmem:[#allocation7 + $0x8] sm:$0xf]
    %v92 = vld [vmem:[%s77] sm:$0x3]
    %v95 = vunpack.c.l.s4 1966171168
    %v96 = vunpack.c.0.s8 %v95
    %v97 = vlaneseq
    %v98 = vshrl.u32 %v97, 7
    %v99 = vsub.s32 %v96, %v98
    %v100 = vrot.slane %v92, %v99
    %v101 = vcombine.high %v100, %v100
    %v102 = vmul.f32 %v88, %v90
    %v103 = vmul.f32 %v89, %v91
    %v104 = vlaneseq
    %v105 = vshrl.u32 %v104, 7
    %v106 = vsub.s32 0, %v105
    %v107 = vrot.slane %v100, %v106
    %v108 = vlaneseq
    %v109 = vshrl.u32 %v108, 7
    %v110 = vsub.s32 0, %v109
    %v111 = vrot.slane %v101, %v110
    %v114 = vmul.f32 %v102, %v107
    %v115 = vmul.f32 %v103, %v111
    %v116 = vmul.f32 %v88, %v88
    %v117 = vmul.f32 %v89, %v89
    %v118 = vmul.f32 %v90, %v90
    %v119 = vmul.f32 %v91, %v91
    %v120 = vadd.f32 %v116, %v118
    %v121 = vadd.f32 %v117, %v119
    %v122 = vmul.f32 %v120, %v107
    %v123 = vmul.f32 %v121, %v111
    %v124 = vld [vmem:[#allocation4 + $0x4] sm:$0xf]
    %v125 = vld [vmem:[#allocation4 + $0xc] sm:$0xf]
    %v126 = vld [vmem:[#allocation7 + $0x4] sm:$0xf]
    %v127 = vld [vmem:[#allocation7 + $0xc] sm:$0xf]
    %v128 = vld [vmem:[%s77 + $0x2] sm:$0x3]
    %v131 = vunpack.c.l.s4 1966171168
    %v132 = vunpack.c.0.s8 %v131
    %v133 = vlaneseq
    %v134 = vshrl.u32 %v133, 7
    %v135 = vsub.s32 %v132, %v134
    %v136 = vrot.slane %v128, %v135
    %v137 = vcombine.high %v136, %v136
    %v138 = vmul.f32 %v124, %v126
    %v139 = vmul.f32 %v125, %v127
    %v140 = vlaneseq
    %v141 = vshrl.u32 %v140, 7
    %v142 = vsub.s32 0, %v141
    %v143 = vrot.slane %v136, %v142
    %v144 = vlaneseq
    %v145 = vshrl.u32 %v144, 7
    %v146 = vsub.s32 0, %v145
    %v147 = vrot.slane %v137, %v146
    %v150 = vmul.f32 %v138, %v143
    %v151 = vmul.f32 %v139, %v147
    %v152 = vmul.f32 %v124, %v124
    %v153 = vmul.f32 %v125, %v125
    %v154 = vmul.f32 %v126, %v126
    %v155 = vmul.f32 %v127, %v127
    %v156 = vadd.f32 %v152, %v154
    %v157 = vadd.f32 %v153, %v155
    %v158 = vmul.f32 %v156, %v143
    %v159 = vmul.f32 %v157, %v147
    %v160 = vadd.f32 %v114, %v150
    %v161 = vadd.f32 %v115, %v151
    %v162 = vadd.f32 %v122, %v158
    %v163 = vadd.f32 %v123, %v159
    %v164 = vld [vmem:[#allocation2] sm:$0xf]
    %v165 = vld [vmem:[#allocation2 + $0x4] sm:$0xf]
    %v166 = vadd.f32 %v164, %v160
    %v167 = vadd.f32 %v165, %v161
    %168 = vst [vmem:[#allocation2] sm:$0xf] %v166
    %169 = vst [vmem:[#allocation2 + $0x4] sm:$0xf] %v167
    %v170 = vld [vmem:[#allocation3] sm:$0xf]
    %v171 = vld [vmem:[#allocation3 + $0x4] sm:$0xf]
    %v172 = vadd.f32 %v170, %v162
    %v173 = vadd.f32 %v171, %v163
    %174 = vst [vmem:[#allocation3] sm:$0xf] %v172
    %175 = vst [vmem:[#allocation3 + $0x4] sm:$0xf] %v173
    // Predicated region
    $region26: #{tpu_custom_call.1} parent=1 // pred_check
      %p176 = pneg %p80
    $region27: #{tpu_custom_call.1} parent=1 // pred_check_branch
      %178 = sbr.rel (%p176) target = $region29
    $region28: #{tpu_custom_call.1} parent=1 // pred_region
      %v179 = vld [vmem:[#allocation2] sm:$0xf]
      %v180 = vld [vmem:[#allocation2 + $0x4] sm:$0xf]
      %vm181 = vcmask 1043456
      %v182 = vsel %vm181, %v179, 0.0
      %183 = vadd.xlane.f32.xlu0 %v182
      %v184 = vpop.xlane.xlu0 %183
      %v185 = vsel %vm181, %v180, 0.0
      %186 = vadd.xlane.f32.xlu0 %v185
      %v187 = vpop.xlane.xlu0 %186
      %v190 = vlaneseq
      %v191 = vand.u32 %v190, 127
      %v192 = vlaneseq
      %v193 = vshrl.u32 %v192, 7
      %v194 = vsub.s32 %v191, %v193
      %v195 = vrot.slane %v184, %v194
      %v196 = vlaneseq
      %v197 = vshrl.u32 %v196, 7
      %v198 = vsub.s32 %v191, %v197
      %v199 = vrot.slane %v187, %v198
      %vm200 = vcmask 1041409
      %v201 = vsel %vm200, %v199, %v195
      %vm203 = vcmask 25600
      %204 = vst.msk [vmem:[#allocation9] sm:$0x3] %vm203, %v201
      %v205 = vld [vmem:[#allocation3] sm:$0xf]
      %v206 = vld [vmem:[#allocation3 + $0x4] sm:$0xf]
      %v207 = vsel %vm181, %v205, 0.0
      %208 = vadd.xlane.f32.xlu0 %v207
      %v209 = vpop.xlane.xlu0 %208
      %v210 = vsel %vm181, %v206, 0.0
      %211 = vadd.xlane.f32.xlu0 %v210
      %v212 = vpop.xlane.xlu0 %211
      %v215 = vlaneseq
      %v216 = vshrl.u32 %v215, 7
      %v217 = vsub.s32 %v191, %v216
      %v218 = vrot.slane %v209, %v217
      %v219 = vlaneseq
      %v220 = vshrl.u32 %v219, 7
      %v221 = vsub.s32 %v191, %v220
      %v222 = vrot.slane %v212, %v221
      %v223 = vsel %vm200, %v222, %v218
      %225 = vst.msk [vmem:[#allocation10] sm:$0x3] %vm203, %v223
    $region29: #{tpu_custom_call.1} parent=1 // pred_fallthru
      _
    // Predicated region
    $region30: #{tpu_custom_call.1} parent=1 // pred_check
      _
    $region31: #{tpu_custom_call.1} parent=1 // pred_check_branch
      %227 = sbr.rel (0) target = $region33
    $region32: #{tpu_custom_call.1} parent=1 // pred_region
      %s229 = ssub.s32 32, 32
      %230 = vsyncadd [#allocation6], %s229
      %s232 = sshll.u32 [#allocation9], 4
      %s233 = int_to_ptr.vmem [resolvable:$true] %s232
      %235 = dma.vmem_to_hbm [thread:$0]  %s233, 32, %s3, [#allocation6]
    $region33: #{tpu_custom_call.1} parent=1 // pred_fallthru
      _
    // Predicated region
    $region34: #{tpu_custom_call.1} parent=1 // pred_check
      _
    $region35: #{tpu_custom_call.1} parent=1 // pred_check_branch
      %237 = sbr.rel (0) target = $region37
    $region36: #{tpu_custom_call.1} parent=1 // pred_region
      %s239 = ssub.s32 32, 32
      %240 = vsyncadd [#allocation11], %s239
      %s242 = sshll.u32 [#allocation10], 4
      %s243 = int_to_ptr.vmem [resolvable:$true] %s242
      %245 = dma.vmem_to_hbm [thread:$0]  %s243, 32, %s4, [#allocation11]
    $region37: #{tpu_custom_call.1} parent=1 // pred_fallthru
      _
    // Predicated region
    $region38: #{tpu_custom_call.1} parent=1 // pred_check
      _
    $region39: #{tpu_custom_call.1} parent=1 // pred_check_branch
      %247 = sbr.rel (0) target = $region41
    $region40: #{tpu_custom_call.1} parent=1 // pred_region
      %248 = dma.done [#allocation6], 32
    $region41: #{tpu_custom_call.1} parent=1 // pred_fallthru
      _
    // Predicated region
    $region42: #{tpu_custom_call.1} parent=1 // pred_check
      _
    $region43: #{tpu_custom_call.1} parent=1 // pred_check_branch
      %250 = sbr.rel (0) target = $region45
    $region44: #{tpu_custom_call.1} parent=1 // pred_region
      %251 = dma.done [#allocation11], 32
    $region45: #{tpu_custom_call.1} parent=1 // pred_fallthru
      _
    %252 = vsyncpa [#allocation5], 1
    %253 = vsyncpa [#allocation8], 1
    %254 = vsyncpa [#allocation6], 1
    %255 = vsyncpa [#allocation11], 1

</llo_original>
